<compile_context>
chip_gen: v5e
topology: v5e:2x2
jax: 0.10.0
libtpu: 0.0.40
codegen_flags: <defaults>
</compile_context>

<pallas_src>
import jax
import jax.numpy as jnp
from jax.experimental import pallas as pl
from jax.experimental.pallas import tpu as pltpu

HIDDEN = 400       # logical hidden width of FCDecoder.fc1
HIDDEN_PAD = 512   # padded to a multiple of 128 lanes (zero-padded)


def _round_up(x, m):
    return ((x + m - 1) // m) * m


def fc_decoder_kernel(z_ref, w1_ref, b1_ref, w2_ref, b2_ref, o_ref, h1_ref):
    """grid = (batch tiles i, output-feature tiles j).

    z / W1 / b1 use constant index maps (resident across j); W2 / b2 / out are
    tiled along the output feature axis.  h1 is computed once per batch tile
    (j == 0, f32 in scratch) and reused for every feature tile of that batch.
    """
    @pl.when(pl.program_id(1) == 0)
    def _():
        h1 = jnp.dot(z_ref[...], w1_ref[...], preferred_element_type=jnp.float32)
        h1_ref[...] = jnp.maximum(h1 + b1_ref[...], 0.0)

    y = jnp.dot(h1_ref[...].astype(jnp.bfloat16), w2_ref[...],
                preferred_element_type=jnp.float32)
    y = y + b2_ref[...]
    o_ref[...] = jax.nn.sigmoid(y)


def fc_decoder(z, w1, b1, w2, b2):
    """FCDecoder forward: sigmoid(relu(z @ W1 + b1) @ W2 + b2).

    z:  [B, latent_dim]
    w1: [latent_dim, 400]   b1: [400]      (fc1.weight pre-transposed)
    w2: [400, input_dim]    b2: [input_dim]
    returns [B, input_dim] float32
    """
    B, latent_dim = z.shape
    input_dim = w2.shape[1]

    # ---- batch tiling (sublane axis): multiple of 8, <=128 rows per tile ----
    TB = min(_round_up(B, 8), 128)
    B_pad = _round_up(B, TB)

    # ---- output-feature tiling (lane axis): multiple of 128, <=2048 wide ----
    n128 = _round_up(input_dim, 128)
    if n128 <= 2048:
        TN, N_pad = n128, n128
    else:
        TN, N_pad = 2048, _round_up(input_dim, 2048)
        for lanes in range(16, 3, -1):            # prefer a tile dividing n128
            if (n128 // 128) % lanes == 0:
                TN, N_pad = 128 * lanes, n128
                break

    # ---- pad + cast operands (zero padding keeps the math identical) ----
    zb = jnp.zeros((B_pad, latent_dim), jnp.bfloat16).at[:B].set(
        z.astype(jnp.bfloat16))
    w1b = jnp.zeros((latent_dim, HIDDEN_PAD), jnp.bfloat16).at[:, :HIDDEN].set(
        w1.astype(jnp.bfloat16))
    b1p = jnp.zeros((1, HIDDEN_PAD), jnp.float32).at[0, :HIDDEN].set(
        b1.astype(jnp.float32).reshape(-1))
    w2b = jnp.zeros((HIDDEN_PAD, N_pad), jnp.bfloat16).at[:HIDDEN, :input_dim].set(
        w2.astype(jnp.bfloat16))
    b2p = jnp.zeros((1, N_pad), jnp.float32).at[0, :input_dim].set(
        b2.astype(jnp.float32).reshape(-1))

    grid = (B_pad // TB, N_pad // TN)

    cost = pl.CostEstimate(
        flops=2 * B_pad * (latent_dim * HIDDEN_PAD + HIDDEN_PAD * N_pad),
        transcendentals=B_pad * N_pad,
        bytes_accessed=(zb.size * 2 + w1b.size * 2 + w2b.size * 2
                        + b1p.size * 4 + b2p.size * 4 + B_pad * N_pad * 4),
    )

    out = pl.pallas_call(
        fc_decoder_kernel,
        out_shape=jax.ShapeDtypeStruct((B_pad, N_pad), jnp.float32),
        grid_spec=pltpu.PrefetchScalarGridSpec(
            num_scalar_prefetch=0,
            grid=grid,
            in_specs=[
                pl.BlockSpec((TB, latent_dim), lambda i, j: (i, 0)),        # z
                pl.BlockSpec((latent_dim, HIDDEN_PAD), lambda i, j: (0, 0)),  # W1
                pl.BlockSpec((1, HIDDEN_PAD), lambda i, j: (0, 0)),         # b1
                pl.BlockSpec((HIDDEN_PAD, TN), lambda i, j: (0, j)),        # W2 tile
                pl.BlockSpec((1, TN), lambda i, j: (0, j)),                 # b2 tile
            ],
            out_specs=pl.BlockSpec((TB, TN), lambda i, j: (i, j)),
            scratch_shapes=[pltpu.VMEM((TB, HIDDEN_PAD), jnp.float32)],     # h1
        ),
        compiler_params=pltpu.CompilerParams(
            # batch tiles shard across TensorCores (v7x megacore); feature tiles
            # stay sequential so the h1 scratch written at j==0 remains valid.
            dimension_semantics=("parallel", "arbitrary"),
        ),
        cost_estimate=cost,
    )(zb, w1b, b1p, w2b, b2p)

    return out[:B, :input_dim]


def init_params(key, latent_dim, input_dim, hidden=HIDDEN):
    """Deterministic synthetic init matching nn.Linear shapes.
    PyTorch fc.weight is (out, in); we store the transposed (in, out) form."""
    k1, k2, k3, k4 = jax.random.split(key, 4)
    w1 = jax.random.normal(k1, (latent_dim, hidden), jnp.float32) * (1.0 / latent_dim) ** 0.5
    b1 = jax.random.normal(k2, (hidden,), jnp.float32) * 0.01
    w2 = jax.random.normal(k3, (hidden, input_dim), jnp.float32) * (1.0 / hidden) ** 0.5
    b2 = jax.random.normal(k4, (input_dim,), jnp.float32) * 0.01
    return w1, b1, w2, b2


if __name__ == "__main__":
    key = jax.random.PRNGKey(0)
    kz, kp = jax.random.split(key)

    B = 8            # batch
    latent_dim = 32  # z dimension
    input_dim = 256  # flattened output dimension (e.g. 16*16 image)

    z = jax.random.normal(kz, (B, latent_dim), jnp.float32)
    w1, b1, w2, b2 = init_params(kp, latent_dim, input_dim)

    out = jax.block_until_ready(fc_decoder(z, w1, b1, w2, b2))

    # pure-JAX f32 reference; kernel uses bf16 weights with f32 accumulation,
    # so allow a small tolerance on the (0,1)-bounded sigmoid output.
    ref = jax.nn.sigmoid(jnp.maximum(z @ w1 + b1[None, :], 0.0) @ w2 + b2[None, :])
    assert out.shape == (B, input_dim)
    err = float(jnp.max(jnp.abs(out - ref)))
    assert err < 2e-2, err

    print("KERNEL_OK")
</pallas_src>

<mosaic_0001>
module attributes {stable_mosaic.version = 11 : i64} {
  func.func @fc_decoder_kernel(%arg0: i32, %arg1: i32, %arg2: memref<8x32xbf16, #tpu.memory_space<vmem>>, %arg3: memref<32x512xbf16, #tpu.memory_space<vmem>>, %arg4: memref<1x512xf32, #tpu.memory_space<vmem>>, %arg5: memref<512x256xbf16, #tpu.memory_space<vmem>>, %arg6: memref<1x256xf32, #tpu.memory_space<vmem>>, %arg7: memref<8x256xf32, #tpu.memory_space<vmem>>, %arg8: memref<8x512xf32, #tpu.memory_space<vmem>>) attributes {dimension_semantics = [#tpu.dimension_semantics<parallel>, #tpu.dimension_semantics<arbitrary>], iteration_bounds = array<i64: 1, 1>, scalar_prefetch = 0 : i64, scratch_operands = 1 : i64, tpu.core_type = #tpu.core_type<tc>, window_params = [{transform_indices = @transform_0, window_bounds = array<i64: 8, 32>}, {pipeline_mode = #tpu.pipeline_mode<synchronous>, transform_indices = @transform_1, window_bounds = array<i64: 32, 512>}, {pipeline_mode = #tpu.pipeline_mode<synchronous>, transform_indices = @transform_2, window_bounds = array<i64: 1, 512>}, {transform_indices = @transform_3, window_bounds = array<i64: 512, 256>}, {transform_indices = @transform_4, window_bounds = array<i64: 1, 256>}, {transform_indices = @transform_5, window_bounds = array<i64: 8, 256>}]} {
    %c0_i32 = arith.constant 0 : i32
    %0 = arith.cmpi eq, %arg1, %c0_i32 : i32
    %1 = arith.extui %0 : i1 to i32
    %c0_i32_0 = arith.constant 0 : i32
    %2 = arith.cmpi ne, %1, %c0_i32_0 : i32
    scf.if %2 {
      %c0_9 = arith.constant 0 : index
      %c0_10 = arith.constant 0 : index
      %16 = vector.load %arg2[%c0_9, %c0_10] : memref<8x32xbf16, #tpu.memory_space<vmem>>, vector<8x32xbf16>
      %c0_11 = arith.constant 0 : index
      %c0_12 = arith.constant 0 : index
      %17 = vector.load %arg3[%c0_11, %c0_12] : memref<32x512xbf16, #tpu.memory_space<vmem>>, vector<32x512xbf16>
      %cst_13 = arith.constant dense<0.000000e+00> : vector<8x512xf32>
      %18 = tpu.matmul %16, %17, %cst_13 {dimension_numbers = #tpu.dot_dimension_numbers<[1], [0], [0], [1], [0, 0, 1, 1], [], []>} : vector<8x32xbf16>, vector<32x512xbf16>, vector<8x512xf32> -> vector<8x512xf32>
      %c0_14 = arith.constant 0 : index
      %c0_15 = arith.constant 0 : index
      %19 = vector.load %arg4[%c0_14, %c0_15] : memref<1x512xf32, #tpu.memory_space<vmem>>, vector<1x512xf32>
      %20 = vector.broadcast %19 : vector<1x512xf32> to vector<8x512xf32>
      %21 = arith.addf %18, %20 : vector<8x512xf32>
      %cst_16 = arith.constant 0.000000e+00 : f32
      %22 = vector.broadcast %cst_16 : f32 to vector<8x512xf32>
      %23 = arith.maximumf %21, %22 : vector<8x512xf32>
      %c0_17 = arith.constant 0 : index
      %c0_18 = arith.constant 0 : index
      %24 = vector.load %arg8[%c0_17, %c0_18] : memref<8x512xf32, #tpu.memory_space<vmem>>, vector<8x512xf32>
      tpu.vector_store %arg8[%c0_17, %c0_18], %23 {strides = array<i32>} : memref<8x512xf32, #tpu.memory_space<vmem>>, vector<8x512xf32>,
    } else {
    }
    %c0 = arith.constant 0 : index
    %c0_1 = arith.constant 0 : index
    %3 = vector.load %arg8[%c0, %c0_1] : memref<8x512xf32, #tpu.memory_space<vmem>>, vector<8x512xf32>
    %4 = arith.truncf %3 : vector<8x512xf32> to vector<8x512xbf16>
    %c0_2 = arith.constant 0 : index
    %c0_3 = arith.constant 0 : index
    %5 = vector.load %arg5[%c0_2, %c0_3] : memref<512x256xbf16, #tpu.memory_space<vmem>>, vector<512x256xbf16>
    %cst = arith.constant dense<0.000000e+00> : vector<8x256xf32>
    %6 = tpu.matmul %4, %5, %cst {dimension_numbers = #tpu.dot_dimension_numbers<[1], [0], [0], [1], [0, 0, 1, 1], [], []>} : vector<8x512xbf16>, vector<512x256xbf16>, vector<8x256xf32> -> vector<8x256xf32>
    %c0_4 = arith.constant 0 : index
    %c0_5 = arith.constant 0 : index
    %7 = vector.load %arg6[%c0_4, %c0_5] : memref<1x256xf32, #tpu.memory_space<vmem>>, vector<1x256xf32>
    %8 = vector.broadcast %7 : vector<1x256xf32> to vector<8x256xf32>
    %9 = arith.addf %6, %8 : vector<8x256xf32>
    %10 = arith.negf %9 : vector<8x256xf32>
    %11 = math.exp %10 : vector<8x256xf32>
    %cst_6 = arith.constant 1.000000e+00 : f32
    %12 = vector.broadcast %cst_6 : f32 to vector<8x256xf32>
    %13 = arith.addf %12, %11 : vector<8x256xf32>
    %14 = arith.divf %12, %13 : vector<8x256xf32>
    %c0_7 = arith.constant 0 : index
    %c0_8 = arith.constant 0 : index
    %15 = vector.load %arg7[%c0_7, %c0_8] : memref<8x256xf32, #tpu.memory_space<vmem>>, vector<8x256xf32>
    tpu.vector_store %arg7[%c0_7, %c0_8], %14 {strides = array<i32>} : memref<8x256xf32, #tpu.memory_space<vmem>>, vector<8x256xf32>,
    return
  }
  func.func @transform_0(%arg0: i32, %arg1: i32) -> (i32, i32) {
    %c0_i32 = arith.constant 0 : i32
    %c0_i32_0 = arith.constant 0 : i32
    return %arg0, %c0_i32 : i32, i32
  }
  func.func @transform_1(%arg0: i32, %arg1: i32) -> (i32, i32) {
    %c0_i32 = arith.constant 0 : i32
    %c0_i32_0 = arith.constant 0 : i32
    %c0_i32_1 = arith.constant 0 : i32
    return %c0_i32, %c0_i32_0 : i32, i32
  }
  func.func @transform_2(%arg0: i32, %arg1: i32) -> (i32, i32) {
    %c0_i32 = arith.constant 0 : i32
    %c0_i32_0 = arith.constant 0 : i32
    %c0_i32_1 = arith.constant 0 : i32
    return %c0_i32, %c0_i32_0 : i32, i32
  }
  func.func @transform_3(%arg0: i32, %arg1: i32) -> (i32, i32) {
    %c0_i32 = arith.constant 0 : i32
    %c0_i32_0 = arith.constant 0 : i32
    return %c0_i32, %arg1 : i32, i32
  }
  func.func @transform_4(%arg0: i32, %arg1: i32) -> (i32, i32) {
    %c0_i32 = arith.constant 0 : i32
    %c0_i32_0 = arith.constant 0 : i32
    return %c0_i32, %arg1 : i32, i32
  }
  func.func @transform_5(%arg0: i32, %arg1: i32) -> (i32, i32) {
    %c0_i32 = arith.constant 0 : i32
    return %arg0, %arg1 : i32, i32
  }
}

</mosaic_0001>

<llo_original>
// kernel: tpu_custom_call.1
$region0: #{tpu_custom_call.1}
  #allocation0 [shape = 'u32[]', space=smem, size = 0x4, offset = 0x4, fixed_abs, tag = 'smem constant byte address 0x4 - core index']
  #allocation1 [shape = 'u32[72,128]{1,0:T(1,128)}', space=vmem, size = 0x9000, scoped, tag = 'internal scratch']
  #allocation2 [shape = 'f32[8,512]{1,0:T(8,128)}', space=vmem, size = 0x4000, scoped, tag = 'scratch operand']
  %s0 = inlined_call_operand.hbm [shape: bf16[8,32], index: 0, kind: input, shape index: {}]
  %s1 = inlined_call_operand.hbm [shape: bf16[32,512], index: 1, kind: input, shape index: {}]
  %s2 = inlined_call_operand.hbm [shape: f32[1,512], index: 2, kind: input, shape index: {}]
  %s3 = inlined_call_operand.hbm [shape: bf16[512,256], index: 3, kind: input, shape index: {}]
  %s4 = inlined_call_operand.vmem [shape: f32[1,256], index: 4, kind: input, shape index: {}]
  %s5 = inlined_call_operand.hbm [shape: f32[8,256], index: 5, kind: output, shape index: {}]
  %s6 = sld [smem:[#allocation0]]
  $region50: #{tpu_custom_call.1} parent=0
    _
  %s8 = ssub.s32 1, %s6
  %s9 = scalar_select 0, %s8, %s6
  $region1: #{tpu_custom_call.1} parent=0
    #allocation3 [shape = 'u8[2048]{0}', space=vmem, size = 0x800, scoped, tag = 'input window, operand 0, single buffered']
    #allocation4 [shape = 's32[1]{0}', space=sflag, size = 0x4, scoped, tag = 'scoped memory for tpu_custom_call.1']
    #allocation5 [shape = 's32[1]{0}', space=sflag, size = 0x4, scoped, tag = 'scoped memory for tpu_custom_call.1']
    #allocation6 [shape = 'u8[32768]{0}', space=vmem, size = 0x8000, scoped, tag = 'input window, operand 1, single buffered']
    #allocation7 [shape = 's32[1]{0}', space=sflag, size = 0x4, scoped, tag = 'scoped memory for tpu_custom_call.1']
    #allocation8 [shape = 'u8[2048]{0}', space=vmem, size = 0x800, scoped, tag = 'input window, operand 2, single buffered']
    #allocation9 [shape = 'u8[262144]{0}', space=vmem, size = 0x40000, scoped, tag = 'input window, operand 3, single buffered']
    #allocation10 [shape = 's32[1]{0}', space=sflag, size = 0x4, scoped, tag = 'scoped memory for tpu_custom_call.1']
    #allocation11 [shape = 'u8[8192]{0}', space=vmem, size = 0x2000, scoped, tag = 'output window, operand 0, single buffered']
    %10 = vsyncpa [#allocation4], 0
    %11 = vsyncpa [#allocation7], 0
    %12 = vsyncpa [#allocation10], 0
    %13 = vsyncpa [#allocation5], 0
    // Predicated region
    $region2: #{tpu_custom_call.1} parent=1 // pred_check
      _
    $region3: #{tpu_custom_call.1} parent=1 // pred_check_branch
      %15 = sbr.rel (0) target = $region5
    $region4: #{tpu_custom_call.1} parent=1 // pred_region
      %17 = vsyncadd [#allocation4], 0
      %s19 = sshll.u32 %s0, 4
      %s20 = int_to_ptr.hbm [resolvable:$true] %s19
      %s21 = sshll.u32 [#allocation3], 4
      %s22 = int_to_ptr.vmem [resolvable:$true] %s21
      %24 = dma.hbm_to_vmem [thread:$0]  %s20, 64, %s22, [#allocation4]
    $region5: #{tpu_custom_call.1} parent=1 // pred_fallthru
      _
    // Predicated region
    $region6: #{tpu_custom_call.1} parent=1 // pred_check
      _
    $region7: #{tpu_custom_call.1} parent=1 // pred_check_branch
      %26 = sbr.rel (0) target = $region9
    $region8: #{tpu_custom_call.1} parent=1 // pred_region
      %28 = vsyncadd [#allocation7], 0
      %s29 = sshll.u32 %s1, 4
      %s30 = int_to_ptr.hbm [resolvable:$true] %s29
      %s31 = sshll.u32 [#allocation6], 4
      %s32 = int_to_ptr.vmem [resolvable:$true] %s31
      %37 = dma.hbm_to_vmem [thread:$0]  %s30, 1024, %s32, [#allocation7], 256, 256, 16
    $region9: #{tpu_custom_call.1} parent=1 // pred_fallthru
      _
    // Predicated region
    $region10: #{tpu_custom_call.1} parent=1 // pred_check
      _
    $region11: #{tpu_custom_call.1} parent=1 // pred_check_branch
      %39 = sbr.rel (0) target = $region13
    $region12: #{tpu_custom_call.1} parent=1 // pred_region
      %41 = vsyncadd [#allocation7], 0
      %s43 = sshll.u32 %s2, 4
      %s44 = int_to_ptr.hbm [resolvable:$true] %s43
      %s45 = sshll.u32 [#allocation8], 4
      %s46 = int_to_ptr.vmem [resolvable:$true] %s45
      %48 = dma.hbm_to_vmem [thread:$0]  %s44, 64, %s46, [#allocation7]
    $region13: #{tpu_custom_call.1} parent=1 // pred_fallthru
      _
    // Predicated region
    $region14: #{tpu_custom_call.1} parent=1 // pred_check
      _
    $region15: #{tpu_custom_call.1} parent=1 // pred_check_branch
      %50 = sbr.rel (0) target = $region17
    $region16: #{tpu_custom_call.1} parent=1 // pred_region
      %52 = vsyncadd [#allocation10], 0
      %s53 = sshll.u32 %s3, 4
      %s54 = int_to_ptr.hbm [resolvable:$true] %s53
      %s55 = sshll.u32 [#allocation9], 4
      %s56 = int_to_ptr.vmem [resolvable:$true] %s55
      %61 = dma.hbm_to_vmem [thread:$0]  %s54, 8192, %s56, [#allocation10], 128, 128, 8
    $region17: #{tpu_custom_call.1} parent=1 // pred_fallthru
      _
    // Predicated region
    $region18: #{tpu_custom_call.1} parent=1 // pred_check
      _
    $region19: #{tpu_custom_call.1} parent=1 // pred_check_branch
      %63 = sbr.rel (0) target = $region21
    $region20: #{tpu_custom_call.1} parent=1 // pred_region
      _
    $region21: #{tpu_custom_call.1} parent=1 // pred_fallthru
      _
    // Predicated region
    $region22: #{tpu_custom_call.1} parent=1 // pred_check
      _
    $region23: #{tpu_custom_call.1} parent=1 // pred_check_branch
      %65 = sbr.rel (0) target = $region25
    $region24: #{tpu_custom_call.1} parent=1 // pred_region
      %67 = dma.done [#allocation4], 64
    $region25: #{tpu_custom_call.1} parent=1 // pred_fallthru
      _
    // Predicated region
    $region26: #{tpu_custom_call.1} parent=1 // pred_check
      _
    $region27: #{tpu_custom_call.1} parent=1 // pred_check_branch
      %69 = sbr.rel (0) target = $region29
    $region28: #{tpu_custom_call.1} parent=1 // pred_region
      %71 = dma.done [#allocation7], 1024
    $region29: #{tpu_custom_call.1} parent=1 // pred_fallthru
      _
    // Predicated region
    $region30: #{tpu_custom_call.1} parent=1 // pred_check
      _
    $region31: #{tpu_custom_call.1} parent=1 // pred_check_branch
      %73 = sbr.rel (0) target = $region33
    $region32: #{tpu_custom_call.1} parent=1 // pred_region
      %75 = dma.done [#allocation7], 64
    $region33: #{tpu_custom_call.1} parent=1 // pred_fallthru
      _
    // Predicated region
    $region34: #{tpu_custom_call.1} parent=1 // pred_check
      _
    $region35: #{tpu_custom_call.1} parent=1 // pred_check_branch
      %77 = sbr.rel (0) target = $region37
    $region36: #{tpu_custom_call.1} parent=1 // pred_region
      %79 = dma.done [#allocation10], 8192
    $region37: #{tpu_custom_call.1} parent=1 // pred_fallthru
      _
    %p81 = scmp.eq.s32.totalorder 0, 0
    // Predicated region
    $region38: #{tpu_custom_call.1} parent=1 // pred_check
      %p82 = pneg %p81
    $region39: #{tpu_custom_call.1} parent=1 // pred_check_branch
      %84 = sbr.rel (%p82) target = $region41
    $region40: #{tpu_custom_call.1} parent=1 // pred_region
      %v85 = vld [vmem:[#allocation3] sm:$0xf]
      %v86 = vld [vmem:[#allocation6] sm:$0xff]
      %v87 = vld [vmem:[#allocation6 + $0x8] sm:$0xff]
      %v88 = vld [vmem:[#allocation6 + $0x10] sm:$0xff]
      %v89 = vld [vmem:[#allocation6 + $0x18] sm:$0xff]
      %v90 = vld [vmem:[#allocation6 + $0x20] sm:$0xff]
      %v91 = vld [vmem:[#allocation6 + $0x28] sm:$0xff]
      %v92 = vld [vmem:[#allocation6 + $0x30] sm:$0xff]
      %v93 = vld [vmem:[#allocation6 + $0x38] sm:$0xff]
      %v94 = vld [vmem:[#allocation8] sm:$0xf]
      %v96 = vperm.slane %v94, 0
      %v97 = vperm.slane %v94, 1
      %v98 = vperm.slane %v94, 2
      %v99 = vperm.slane %v94, 3
      %v112 = vunpack.c.l.b16 %v86
      %v113 = vunpack.c.h.b16 %v86
      %v114 = vunpack.c.l.b16 %v87
      %v115 = vunpack.c.h.b16 %v87
      %v116 = vunpack.c.l.b16 %v88
      %v117 = vunpack.c.h.b16 %v88
      %v118 = vunpack.c.l.b16 %v89
      %v119 = vunpack.c.h.b16 %v89
      %v120 = vunpack.c.l.b16 %v90
      %v121 = vunpack.c.h.b16 %v90
      %v122 = vunpack.c.l.b16 %v91
      %v123 = vunpack.c.h.b16 %v91
      %v124 = vunpack.c.l.b16 %v92
      %v125 = vunpack.c.h.b16 %v92
      %v126 = vunpack.c.l.b16 %v93
      %v127 = vunpack.c.h.b16 %v93
      %v128 = vpack.c.b16 %v116, %v112
      %v129 = vpack.c.b16 %v117, %v113
      %v130 = vpack.c.b16 %v118, %v114
      %v131 = vpack.c.b16 %v119, %v115
      %v132 = vpack.c.b16 %v124, %v120
      %v133 = vpack.c.b16 %v125, %v121
      %v134 = vpack.c.b16 %v126, %v122
      %v135 = vpack.c.b16 %v127, %v123
      %vm144 = vcmask 261120
      %v146 = vsel %vm144, %v85, 0
      %148 = vmatpush.bf16.msra.mxu0 0
      %149 = vmatpush.bf16.msra.mxu0 0
      %150 = vmatpush.bf16.msra.mxu0 0
      %151 = vmatpush.bf16.msra.mxu0 0
      %152 = vmatpush.bf16.msra.mxu0 0
      %153 = vmatpush.bf16.msra.mxu0 0
      %154 = vmatpush.bf16.msra.mxu0 %v132
      %155 = vmatpush.bf16.msra.mxu0 %v128
      %156 = vmatmul.bf16.gmra.mxu0 %v146
      %v157 = vpop.f32.mrf.mxu0
      %v158 = vadd.f32 %v96, %v157
      %v159 = vpop.f32.mrf.mxu0
      %160 = vdwg.mxu0
      %161 = vmatpush.bf16.msra.mxu0 0
      %162 = vmatpush.bf16.msra.mxu0 0
      %163 = vmatpush.bf16.msra.mxu0 0
      %164 = vmatpush.bf16.msra.mxu0 0
      %165 = vmatpush.bf16.msra.mxu0 0
      %166 = vmatpush.bf16.msra.mxu0 0
      %167 = vmatpush.bf16.msra.mxu0 %v133
      %168 = vmatpush.bf16.msra.mxu0 %v129
      %169 = vmatmul.bf16.gmra.mxu0 %v146
      %v170 = vpop.f32.mrf.mxu0
      %v171 = vadd.f32 %v97, %v170
      %v172 = vpop.f32.mrf.mxu0
      %173 = vdwg.mxu0
      %174 = vmatpush.bf16.msra.mxu0 0
      %175 = vmatpush.bf16.msra.mxu0 0
      %176 = vmatpush.bf16.msra.mxu0 0
      %177 = vmatpush.bf16.msra.mxu0 0
      %178 = vmatpush.bf16.msra.mxu0 0
      %179 = vmatpush.bf16.msra.mxu0 0
      %180 = vmatpush.bf16.msra.mxu0 %v134
      %181 = vmatpush.bf16.msra.mxu0 %v130
      %182 = vmatmul.bf16.gmra.mxu0 %v146
      %v183 = vpop.f32.mrf.mxu0
      %v184 = vadd.f32 %v98, %v183
      %v185 = vpop.f32.mrf.mxu0
      %186 = vdwg.mxu0
      %187 = vmatpush.bf16.msra.mxu0 0
      %188 = vmatpush.bf16.msra.mxu0 0
      %189 = vmatpush.bf16.msra.mxu0 0
      %190 = vmatpush.bf16.msra.mxu0 0
      %191 = vmatpush.bf16.msra.mxu0 0
      %192 = vmatpush.bf16.msra.mxu0 0
      %193 = vmatpush.bf16.msra.mxu0 %v135
      %194 = vmatpush.bf16.msra.mxu0 %v131
      %195 = vmatmul.bf16.gmra.mxu0 %v146
      %v196 = vpop.f32.mrf.mxu0
      %v197 = vadd.f32 %v99, %v196
      %v198 = vpop.f32.mrf.mxu0
      %199 = vdwg.mxu0
      %v200 = vmax.f32 %v158, 0.0
      %v201 = vmax.f32 %v171, 0.0
      %v202 = vmax.f32 %v184, 0.0
      %v203 = vmax.f32 %v197, 0.0
      %204 = vst [vmem:[#allocation2] sm:$0xff] %v200
      %205 = vst [vmem:[#allocation2 + $0x8] sm:$0xff] %v201
      %206 = vst [vmem:[#allocation2 + $0x10] sm:$0xff] %v202
      %207 = vst [vmem:[#allocation2 + $0x18] sm:$0xff] %v203
    $region41: #{tpu_custom_call.1} parent=1 // pred_fallthru
      _
    %v208 = vld [vmem:[#allocation2] sm:$0xff]
    %v209 = vld [vmem:[#allocation2 + $0x8] sm:$0xff]
    %v210 = vld [vmem:[#allocation2 + $0x10] sm:$0xff]
    %v211 = vld [vmem:[#allocation2 + $0x18] sm:$0xff]
    %v212 = vpack.c.bf16 %v208, %v208
    %v213 = vpack.c.bf16 %v209, %v209
    %v214 = vpack.c.bf16 %v210, %v210
    %v215 = vpack.c.bf16 %v211, %v211
    %v216 = vld [vmem:[#allocation9] sm:$0xff]
    %v217 = vld [vmem:[#allocation9 + $0x8] sm:$0xff]
    %v218 = vld [vmem:[#allocation9 + $0x10] sm:$0xff]
    %v219 = vld [vmem:[#allocation9 + $0x18] sm:$0xff]
    %v220 = vld [vmem:[#allocation9 + $0x20] sm:$0xff]
    %v221 = vld [vmem:[#allocation9 + $0x28] sm:$0xff]
    %v222 = vld [vmem:[#allocation9 + $0x30] sm:$0xff]
    %v223 = vld [vmem:[#allocation9 + $0x38] sm:$0xff]
    %v224 = vld [vmem:[#allocation9 + $0x40] sm:$0xff]
    %v225 = vld [vmem:[#allocation9 + $0x48] sm:$0xff]
    %v226 = vld [vmem:[#allocation9 + $0x50] sm:$0xff]
    %v227 = vld [vmem:[#allocation9 + $0x58] sm:$0xff]
    %v228 = vld [vmem:[#allocation9 + $0x60] sm:$0xff]
    %v229 = vld [vmem:[#allocation9 + $0x68] sm:$0xff]
    %v230 = vld [vmem:[#allocation9 + $0x70] sm:$0xff]
    %v231 = vld [vmem:[#allocation9 + $0x78] sm:$0xff]
    %v232 = vld [vmem:[#allocation9 + $0x80] sm:$0xff]
    %v233 = vld [vmem:[#allocation9 + $0x88] sm:$0xff]
    %v234 = vld [vmem:[#allocation9 + $0x90] sm:$0xff]
    %v235 = vld [vmem:[#allocation9 + $0x98] sm:$0xff]
    %v236 = vld [vmem:[#allocation9 + $0xa0] sm:$0xff]
    %v237 = vld [vmem:[#allocation9 + $0xa8] sm:$0xff]
    %v238 = vld [vmem:[#allocation9 + $0xb0] sm:$0xff]
    %v239 = vld [vmem:[#allocation9 + $0xb8] sm:$0xff]
    %v240 = vld [vmem:[#allocation9 + $0xc0] sm:$0xff]
    %v241 = vld [vmem:[#allocation9 + $0xc8] sm:$0xff]
    %v242 = vld [vmem:[#allocation9 + $0xd0] sm:$0xff]
    %v243 = vld [vmem:[#allocation9 + $0xd8] sm:$0xff]
    %v244 = vld [vmem:[#allocation9 + $0xe0] sm:$0xff]
    %v245 = vld [vmem:[#allocation9 + $0xe8] sm:$0xff]
    %v246 = vld [vmem:[#allocation9 + $0xf0] sm:$0xff]
    %v247 = vld [vmem:[#allocation9 + $0xf8] sm:$0xff]
    %v248 = vld [vmem:[#allocation9 + $0x100] sm:$0xff]
    %v249 = vld [vmem:[#allocation9 + $0x108] sm:$0xff]
    %v250 = vld [vmem:[#allocation9 + $0x110] sm:$0xff]
    %v251 = vld [vmem:[#allocation9 + $0x118] sm:$0xff]
    %v252 = vld [vmem:[#allocation9 + $0x120] sm:$0xff]
    %v253 = vld [vmem:[#allocation9 + $0x128] sm:$0xff]
    %v254 = vld [vmem:[#allocation9 + $0x130] sm:$0xff]
    %v255 = vld [vmem:[#allocation9 + $0x138] sm:$0xff]
    %v256 = vld [vmem:[#allocation9 + $0x140] sm:$0xff]
    %v257 = vld [vmem:[#allocation9 + $0x148] sm:$0xff]
    %v258 = vld [vmem:[#allocation9 + $0x150] sm:$0xff]
    %v259 = vld [vmem:[#allocation9 + $0x158] sm:$0xff]
    %v260 = vld [vmem:[#allocation9 + $0x160] sm:$0xff]
    %v261 = vld [vmem:[#allocation9 + $0x168] sm:$0xff]
    %v262 = vld [vmem:[#allocation9 + $0x170] sm:$0xff]
    %v263 = vld [vmem:[#allocation9 + $0x178] sm:$0xff]
    %v264 = vld [vmem:[#allocation9 + $0x180] sm:$0xff]
    %v265 = vld [vmem:[#allocation9 + $0x188] sm:$0xff]
    %v266 = vld [vmem:[#allocation9 + $0x190] sm:$0xff]
    %v267 = vld [vmem:[#allocation9 + $0x198] sm:$0xff]
    %v268 = vld [vmem:[#allocation9 + $0x1a0] sm:$0xff]
    %v269 = vld [vmem:[#allocation9 + $0x1a8] sm:$0xff]
    %v270 = vld [vmem:[#allocation9 + $0x1b0] sm:$0xff]
    %v271 = vld [vmem:[#allocation9 + $0x1b8] sm:$0xff]
    %v272 = vld [vmem:[#allocation9 + $0x1c0] sm:$0xff]
    %v273 = vld [vmem:[#allocation9 + $0x1c8] sm:$0xff]
    %v274 = vld [vmem:[#allocation9 + $0x1d0] sm:$0xff]
    %v275 = vld [vmem:[#allocation9 + $0x1d8] sm:$0xff]
    %v276 = vld [vmem:[#allocation9 + $0x1e0] sm:$0xff]
    %v277 = vld [vmem:[#allocation9 + $0x1e8] sm:$0xff]
    %v278 = vld [vmem:[#allocation9 + $0x1f0] sm:$0xff]
    %v279 = vld [vmem:[#allocation9 + $0x1f8] sm:$0xff]
    %v280 = vld [vmem:[%s4] sm:$0x3]
    %v282 = vperm.slane %v280, 0
    %v283 = vperm.slane %v280, 1
    %v350 = vunpack.c.l.b16 %v216
    %v351 = vunpack.c.h.b16 %v216
    %v352 = vunpack.c.l.b16 %v217
    %v353 = vunpack.c.h.b16 %v217
    %v354 = vunpack.c.l.b16 %v218
    %v355 = vunpack.c.h.b16 %v218
    %v356 = vunpack.c.l.b16 %v219
    %v357 = vunpack.c.h.b16 %v219
    %v358 = vunpack.c.l.b16 %v220
    %v359 = vunpack.c.h.b16 %v220
    %v360 = vunpack.c.l.b16 %v221
    %v361 = vunpack.c.h.b16 %v221
    %v362 = vunpack.c.l.b16 %v222
    %v363 = vunpack.c.h.b16 %v222
    %v364 = vunpack.c.l.b16 %v223
    %v365 = vunpack.c.h.b16 %v223
    %v366 = vunpack.c.l.b16 %v224
    %v367 = vunpack.c.h.b16 %v224
    %v368 = vunpack.c.l.b16 %v225
    %v369 = vunpack.c.h.b16 %v225
    %v370 = vunpack.c.l.b16 %v226
    %v371 = vunpack.c.h.b16 %v226
    %v372 = vunpack.c.l.b16 %v227
    %v373 = vunpack.c.h.b16 %v227
    %v374 = vunpack.c.l.b16 %v228
    %v375 = vunpack.c.h.b16 %v228
    %v376 = vunpack.c.l.b16 %v229
    %v377 = vunpack.c.h.b16 %v229
    %v378 = vunpack.c.l.b16 %v230
    %v379 = vunpack.c.h.b16 %v230
    %v380 = vunpack.c.l.b16 %v231
    %v381 = vunpack.c.h.b16 %v231
    %v382 = vunpack.c.l.b16 %v232
    %v383 = vunpack.c.h.b16 %v232
    %v384 = vunpack.c.l.b16 %v233
    %v385 = vunpack.c.h.b16 %v233
    %v386 = vunpack.c.l.b16 %v234
    %v387 = vunpack.c.h.b16 %v234
    %v388 = vunpack.c.l.b16 %v235
    %v389 = vunpack.c.h.b16 %v235
    %v390 = vunpack.c.l.b16 %v236
    %v391 = vunpack.c.h.b16 %v236
    %v392 = vunpack.c.l.b16 %v237
    %v393 = vunpack.c.h.b16 %v237
    %v394 = vunpack.c.l.b16 %v238
    %v395 = vunpack.c.h.b16 %v238
    %v396 = vunpack.c.l.b16 %v239
    %v397 = vunpack.c.h.b16 %v239
    %v398 = vunpack.c.l.b16 %v240
    %v399 = vunpack.c.h.b16 %v240
    %v400 = vunpack.c.l.b16 %v241
    %v401 = vunpack.c.h.b16 %v241
    %v402 = vunpack.c.l.b16 %v242
    %v403 = vunpack.c.h.b16 %v242
    %v404 = vunpack.c.l.b16 %v243
    %v405 = vunpack.c.h.b16 %v243
    %v406 = vunpack.c.l.b16 %v244
    %v407 = vunpack.c.h.b16 %v244
    %v408 = vunpack.c.l.b16 %v245
    %v409 = vunpack.c.h.b16 %v245
    %v410 = vunpack.c.l.b16 %v246
    %v411 = vunpack.c.h.b16 %v246
    %v412 = vunpack.c.l.b16 %v247
    %v413 = vunpack.c.h.b16 %v247
    %v414 = vunpack.c.l.b16 %v248
    %v415 = vunpack.c.h.b16 %v248
    %v416 = vunpack.c.l.b16 %v249
    %v417 = vunpack.c.h.b16 %v249
    %v418 = vunpack.c.l.b16 %v250
    %v419 = vunpack.c.h.b16 %v250
    %v420 = vunpack.c.l.b16 %v251
    %v421 = vunpack.c.h.b16 %v251
    %v422 = vunpack.c.l.b16 %v252
    %v423 = vunpack.c.h.b16 %v252
    %v424 = vunpack.c.l.b16 %v253
    %v425 = vunpack.c.h.b16 %v253
    %v426 = vunpack.c.l.b16 %v254
    %v427 = vunpack.c.h.b16 %v254
    %v428 = vunpack.c.l.b16 %v255
    %v429 = vunpack.c.h.b16 %v255
    %v430 = vunpack.c.l.b16 %v256
    %v431 = vunpack.c.h.b16 %v256
    %v432 = vunpack.c.l.b16 %v257
    %v433 = vunpack.c.h.b16 %v257
    %v434 = vunpack.c.l.b16 %v258
    %v435 = vunpack.c.h.b16 %v258
    %v436 = vunpack.c.l.b16 %v259
    %v437 = vunpack.c.h.b16 %v259
    %v438 = vunpack.c.l.b16 %v260
    %v439 = vunpack.c.h.b16 %v260
    %v440 = vunpack.c.l.b16 %v261
    %v441 = vunpack.c.h.b16 %v261
    %v442 = vunpack.c.l.b16 %v262
    %v443 = vunpack.c.h.b16 %v262
    %v444 = vunpack.c.l.b16 %v263
    %v445 = vunpack.c.h.b16 %v263
    %v446 = vunpack.c.l.b16 %v264
    %v447 = vunpack.c.h.b16 %v264
    %v448 = vunpack.c.l.b16 %v265
    %v449 = vunpack.c.h.b16 %v265
    %v450 = vunpack.c.l.b16 %v266
    %v451 = vunpack.c.h.b16 %v266
    %v452 = vunpack.c.l.b16 %v267
    %v453 = vunpack.c.h.b16 %v267
    %v454 = vunpack.c.l.b16 %v268
    %v455 = vunpack.c.h.b16 %v268
    %v456 = vunpack.c.l.b16 %v269
    %v457 = vunpack.c.h.b16 %v269
    %v458 = vunpack.c.l.b16 %v270
    %v459 = vunpack.c.h.b16 %v270
    %v460 = vunpack.c.l.b16 %v271
    %v461 = vunpack.c.h.b16 %v271
    %v462 = vunpack.c.l.b16 %v272
    %v463 = vunpack.c.h.b16 %v272
    %v464 = vunpack.c.l.b16 %v273
    %v465 = vunpack.c.h.b16 %v273
    %v466 = vunpack.c.l.b16 %v274
    %v467 = vunpack.c.h.b16 %v274
    %v468 = vunpack.c.l.b16 %v275
    %v469 = vunpack.c.h.b16 %v275
    %v470 = vunpack.c.l.b16 %v276
    %v471 = vunpack.c.h.b16 %v276
    %v472 = vunpack.c.l.b16 %v277
    %v473 = vunpack.c.h.b16 %v277
    %v474 = vunpack.c.l.b16 %v278
    %v475 = vunpack.c.h.b16 %v278
    %v476 = vunpack.c.l.b16 %v279
    %v477 = vunpack.c.h.b16 %v279
    %v478 = vpack.c.b16 %v352, %v350
    %v479 = vpack.c.b16 %v353, %v351
    %v480 = vpack.c.b16 %v356, %v354
    %v481 = vpack.c.b16 %v357, %v355
    %v482 = vpack.c.b16 %v360, %v358
    %v483 = vpack.c.b16 %v361, %v359
    %v484 = vpack.c.b16 %v364, %v362
    %v485 = vpack.c.b16 %v365, %v363
    %v486 = vpack.c.b16 %v368, %v366
    %v487 = vpack.c.b16 %v369, %v367
    %v488 = vpack.c.b16 %v372, %v370
    %v489 = vpack.c.b16 %v373, %v371
    %v490 = vpack.c.b16 %v376, %v374
    %v491 = vpack.c.b16 %v377, %v375
    %v492 = vpack.c.b16 %v380, %v378
    %v493 = vpack.c.b16 %v381, %v379
    %v494 = vpack.c.b16 %v384, %v382
    %v495 = vpack.c.b16 %v385, %v383
    %v496 = vpack.c.b16 %v388, %v386
    %v497 = vpack.c.b16 %v389, %v387
    %v498 = vpack.c.b16 %v392, %v390
    %v499 = vpack.c.b16 %v393, %v391
    %v500 = vpack.c.b16 %v396, %v394
    %v501 = vpack.c.b16 %v397, %v395
    %v502 = vpack.c.b16 %v400, %v398
    %v503 = vpack.c.b16 %v401, %v399
    %v504 = vpack.c.b16 %v404, %v402
    %v505 = vpack.c.b16 %v405, %v403
    %v506 = vpack.c.b16 %v408, %v406
    %v507 = vpack.c.b16 %v409, %v407
    %v508 = vpack.c.b16 %v412, %v410
    %v509 = vpack.c.b16 %v413, %v411
    %v510 = vpack.c.b16 %v416, %v414
    %v511 = vpack.c.b16 %v417, %v415
    %v512 = vpack.c.b16 %v420, %v418
    %v513 = vpack.c.b16 %v421, %v419
    %v514 = vpack.c.b16 %v424, %v422
    %v515 = vpack.c.b16 %v425, %v423
    %v516 = vpack.c.b16 %v428, %v426
    %v517 = vpack.c.b16 %v429, %v427
    %v518 = vpack.c.b16 %v432, %v430
    %v519 = vpack.c.b16 %v433, %v431
    %v520 = vpack.c.b16 %v436, %v434
    %v521 = vpack.c.b16 %v437, %v435
    %v522 = vpack.c.b16 %v440, %v438
    %v523 = vpack.c.b16 %v441, %v439
    %v524 = vpack.c.b16 %v444, %v442
    %v525 = vpack.c.b16 %v445, %v443
    %v526 = vpack.c.b16 %v448, %v446
    %v527 = vpack.c.b16 %v449, %v447
    %v528 = vpack.c.b16 %v452, %v450
    %v529 = vpack.c.b16 %v453, %v451
    %v530 = vpack.c.b16 %v456, %v454
    %v531 = vpack.c.b16 %v457, %v455
    %v532 = vpack.c.b16 %v460, %v458
    %v533 = vpack.c.b16 %v461, %v459
    %v534 = vpack.c.b16 %v464, %v462
    %v535 = vpack.c.b16 %v465, %v463
    %v536 = vpack.c.b16 %v468, %v466
    %v537 = vpack.c.b16 %v469, %v467
    %v538 = vpack.c.b16 %v472, %v470
    %v539 = vpack.c.b16 %v473, %v471
    %v540 = vpack.c.b16 %v476, %v474
    %v541 = vpack.c.b16 %v477, %v475
    %606 = vmatpush.bf16.msra.mxu0 %v492
    %607 = vmatpush.bf16.msra.mxu0 %v490
    %608 = vmatpush.bf16.msra.mxu0 %v488
    %609 = vmatpush.bf16.msra.mxu0 %v486
    %610 = vmatpush.bf16.msra.mxu0 %v484
    %611 = vmatpush.bf16.msra.mxu0 %v482
    %612 = vmatpush.bf16.msra.mxu0 %v480
    %613 = vmatpush.bf16.msra.mxu0 %v478
    %614 = vmatmul.bf16.gmra.mxu0 %v212
    %v615 = vpop.f32.mrf.mxu0
    %v616 = vadd.f32 %v282, %v615
    %v617 = vpop.f32.mrf.mxu0
    %618 = vdwg.mxu0
    %619 = vmatpush.bf16.msra.mxu0 %v508
    %620 = vmatpush.bf16.msra.mxu0 %v506
    %621 = vmatpush.bf16.msra.mxu0 %v504
    %622 = vmatpush.bf16.msra.mxu0 %v502
    %623 = vmatpush.bf16.msra.mxu0 %v500
    %624 = vmatpush.bf16.msra.mxu0 %v498
    %625 = vmatpush.bf16.msra.mxu0 %v496
    %626 = vmatpush.bf16.msra.mxu0 %v494
    %627 = vmatmul.bf16.gmra.mxu0 %v213
    %v628 = vpop.f32.mrf.mxu0
    %v629 = vadd.f32 %v616, %v628
    %v630 = vpop.f32.mrf.mxu0
    %631 = vdwg.mxu0
    %632 = vmatpush.bf16.msra.mxu0 %v524
    %633 = vmatpush.bf16.msra.mxu0 %v522
    %634 = vmatpush.bf16.msra.mxu0 %v520
    %635 = vmatpush.bf16.msra.mxu0 %v518
    %636 = vmatpush.bf16.msra.mxu0 %v516
    %637 = vmatpush.bf16.msra.mxu0 %v514
    %638 = vmatpush.bf16.msra.mxu0 %v512
    %639 = vmatpush.bf16.msra.mxu0 %v510
    %640 = vmatmul.bf16.gmra.mxu0 %v214
    %v641 = vpop.f32.mrf.mxu0
    %v642 = vadd.f32 %v629, %v641
    %v643 = vpop.f32.mrf.mxu0
    %644 = vdwg.mxu0
    %645 = vmatpush.bf16.msra.mxu0 %v540
    %646 = vmatpush.bf16.msra.mxu0 %v538
    %647 = vmatpush.bf16.msra.mxu0 %v536
    %648 = vmatpush.bf16.msra.mxu0 %v534
    %649 = vmatpush.bf16.msra.mxu0 %v532
    %650 = vmatpush.bf16.msra.mxu0 %v530
    %651 = vmatpush.bf16.msra.mxu0 %v528
    %652 = vmatpush.bf16.msra.mxu0 %v526
    %653 = vmatmul.bf16.gmra.mxu0 %v215
    %v654 = vpop.f32.mrf.mxu0
    %v655 = vadd.f32 %v642, %v654
    %v656 = vpop.f32.mrf.mxu0
    %657 = vdwg.mxu0
    %658 = vmatpush.bf16.msra.mxu0 %v493
    %659 = vmatpush.bf16.msra.mxu0 %v491
    %660 = vmatpush.bf16.msra.mxu0 %v489
    %661 = vmatpush.bf16.msra.mxu0 %v487
    %662 = vmatpush.bf16.msra.mxu0 %v485
    %663 = vmatpush.bf16.msra.mxu0 %v483
    %664 = vmatpush.bf16.msra.mxu0 %v481
    %665 = vmatpush.bf16.msra.mxu0 %v479
    %666 = vmatmul.bf16.gmra.mxu0 %v212
    %v667 = vpop.f32.mrf.mxu0
    %v668 = vadd.f32 %v283, %v667
    %v669 = vpop.f32.mrf.mxu0
    %670 = vdwg.mxu0
    %671 = vmatpush.bf16.msra.mxu0 %v509
    %672 = vmatpush.bf16.msra.mxu0 %v507
    %673 = vmatpush.bf16.msra.mxu0 %v505
    %674 = vmatpush.bf16.msra.mxu0 %v503
    %675 = vmatpush.bf16.msra.mxu0 %v501
    %676 = vmatpush.bf16.msra.mxu0 %v499
    %677 = vmatpush.bf16.msra.mxu0 %v497
    %678 = vmatpush.bf16.msra.mxu0 %v495
    %679 = vmatmul.bf16.gmra.mxu0 %v213
    %v680 = vpop.f32.mrf.mxu0
    %v681 = vadd.f32 %v668, %v680
    %v682 = vpop.f32.mrf.mxu0
    %683 = vdwg.mxu0
    %684 = vmatpush.bf16.msra.mxu0 %v525
    %685 = vmatpush.bf16.msra.mxu0 %v523
    %686 = vmatpush.bf16.msra.mxu0 %v521
    %687 = vmatpush.bf16.msra.mxu0 %v519
    %688 = vmatpush.bf16.msra.mxu0 %v517
    %689 = vmatpush.bf16.msra.mxu0 %v515
    %690 = vmatpush.bf16.msra.mxu0 %v513
    %691 = vmatpush.bf16.msra.mxu0 %v511
    %692 = vmatmul.bf16.gmra.mxu0 %v214
    %v693 = vpop.f32.mrf.mxu0
    %v694 = vadd.f32 %v681, %v693
    %v695 = vpop.f32.mrf.mxu0
    %696 = vdwg.mxu0
    %697 = vmatpush.bf16.msra.mxu0 %v541
    %698 = vmatpush.bf16.msra.mxu0 %v539
    %699 = vmatpush.bf16.msra.mxu0 %v537
    %700 = vmatpush.bf16.msra.mxu0 %v535
    %701 = vmatpush.bf16.msra.mxu0 %v533
    %702 = vmatpush.bf16.msra.mxu0 %v531
    %703 = vmatpush.bf16.msra.mxu0 %v529
    %704 = vmatpush.bf16.msra.mxu0 %v527
    %705 = vmatmul.bf16.gmra.mxu0 %v215
    %v706 = vpop.f32.mrf.mxu0
    %v707 = vadd.f32 %v694, %v706
    %v708 = vpop.f32.mrf.mxu0
    %709 = vdwg.mxu0
    %v710 = vxor.u32 %v655, 2147483648
    %v711 = vxor.u32 %v707, 2147483648
    %v712 = vmul.f32 %v710, 1.442695
    %v713 = vpow.pop %v712
    %v714 = vmul.f32 %v711, 1.442695
    %v715 = vpow.pop %v714
    %v716 = vadd.f32 %v713, 1.0
    %v717 = vadd.f32 %v715, 1.0
    %v718 = vrcp.pop %v716
    %v719 = vmul.f32 %v716, %v718
    %v720 = vsub.f32 1.0, %v719
    %v721 = vmul.f32 %v718, %v720
    %v722 = vadd.f32 %v718, %v721
    %vm723 = vweird.f32 %v716
    %vm724 = vweird.f32 %v718
    %vm725 = vmor %vm723, %vm724
    %v726 = vsel %vm725, %v718, %v722
    %v727 = vand.u32 2147483647, %v716
    %vm728 = vcmp.eq.f32.partialorder %v727, 8.507059e+37
    %v729 = vand.u32 %v716, 2147483648
    %v730 = vor.u32 1.1754944e-38, %v729
    %v731 = vsel %vm728, %v730, %v726
    %v732 = vmul.f32 1.0, %v731
    %v733 = vrcp.pop %v717
    %v734 = vmul.f32 %v717, %v733
    %v735 = vsub.f32 1.0, %v734
    %v736 = vmul.f32 %v733, %v735
    %v737 = vadd.f32 %v733, %v736
    %vm738 = vweird.f32 %v717
    %vm739 = vweird.f32 %v733
    %vm740 = vmor %vm738, %vm739
    %v741 = vsel %vm740, %v733, %v737
    %v742 = vand.u32 2147483647, %v717
    %vm743 = vcmp.eq.f32.partialorder %v742, 8.507059e+37
    %v744 = vand.u32 %v717, 2147483648
    %v745 = vor.u32 1.1754944e-38, %v744
    %v746 = vsel %vm743, %v745, %v741
    %v747 = vmul.f32 1.0, %v746
    %748 = vst [vmem:[#allocation11] sm:$0xff] %v732
    %749 = vst [vmem:[#allocation11 + $0x8] sm:$0xff] %v747
    // Predicated region
    $region42: #{tpu_custom_call.1} parent=1 // pred_check
      _
    $region43: #{tpu_custom_call.1} parent=1 // pred_check_branch
      %751 = sbr.rel (0) target = $region45
    $region44: #{tpu_custom_call.1} parent=1 // pred_region
      %753 = vsyncadd [#allocation5], 0
      %s755 = sshll.u32 [#allocation11], 4
      %s756 = int_to_ptr.vmem [resolvable:$true] %s755
      %s757 = sshll.u32 %s5, 4
      %s758 = int_to_ptr.hbm [resolvable:$true] %s757
      %760 = dma.vmem_to_hbm [thread:$0]  %s756, 256, %s758, [#allocation5]
    $region45: #{tpu_custom_call.1} parent=1 // pred_fallthru
      _
    // Predicated region
    $region46: #{tpu_custom_call.1} parent=1 // pred_check
      _
    $region47: #{tpu_custom_call.1} parent=1 // pred_check_branch
      %762 = sbr.rel (0) target = $region49
    $region48: #{tpu_custom_call.1} parent=1 // pred_region
      %764 = dma.done [#allocation5], 256
    $region49: #{tpu_custom_call.1} parent=1 // pred_fallthru
      _
    %765 = vsyncpa [#allocation4], 1
    %766 = vsyncpa [#allocation7], 1
    %767 = vsyncpa [#allocation10], 1
    %768 = vsyncpa [#allocation5], 1

</llo_original>
